<compile_context>
chip_gen: v5e
topology: v5e:2x2
jax: 0.10.0
libtpu: 0.0.40
codegen_flags: <defaults>
</compile_context>

<pallas_src>
import functools
import math

import jax
import jax.numpy as jnp
from jax import lax
from jax.experimental import pallas as pl
from jax.experimental.pallas import tpu as pltpu


_INV_SQRT2 = 1.0 / math.sqrt(2.0)


def _gelu_exact(x):
    # HF "gelu": 0.5 * x * (1 + erf(x / sqrt(2)))
    return 0.5 * x * (1.0 + lax.erf(x * _INV_SQRT2))


def _intermediate_kernel(x_ref, g_ref, bln_ref, w_ref, b_ref, o_ref, *, eps):
    # x_ref:   (tm, H)   token tile
    # g_ref:   (1, H)    layernorm weight
    # bln_ref: (1, H)    layernorm bias
    # w_ref:   (H, tn)   dense-weight tile ([H, I] layout, tiled along I)
    # b_ref:   (1, tn)   dense-bias tile
    # o_ref:   (tm, tn)
    x = x_ref[...].astype(jnp.float32)            # fp32_cast_layer_norm semantics

    # AlexaTMLayerNorm: "variance" is the mean of squares (uncentered).
    msq = jnp.mean(x * x, axis=-1, keepdims=True)
    mean = jnp.mean(x, axis=-1, keepdims=True)
    y = (x - mean) * lax.rsqrt(msq + eps)

    # Cast the normalized value back to the matmul compute dtype (= weight dtype)
    # before the elementwise affine, matching the reference's .to(orig_dtype).
    cdt = w_ref.dtype
    y = y.astype(cdt) * g_ref[...].astype(cdt) + bln_ref[...].astype(cdt)

    # MXU matmul with f32 accumulation; bias add + GELU stay in f32.
    z = jnp.dot(y, w_ref[...], preferred_element_type=jnp.float32)
    z = z + b_ref[...].astype(jnp.float32)
    o_ref[...] = _gelu_exact(z).astype(o_ref.dtype)


def prepare_dense_weight(dense_w, compute_dtype=None):
    """PyTorch [I, H] weight -> kernel [H, I] layout. Do this ONCE at load time,
    optionally casting to bf16 so the MXU runs its bf16 path."""
    w = dense_w.T
    if compute_dtype is not None:
        w = w.astype(compute_dtype)
    return w


def alexa_tm_intermediate(x, ln_w, ln_b, w_hi, dense_b, *, eps=1e-5,
                          tm=512, tn=512, out_dtype=None,
                          vmem_limit_bytes=48 * 1024 * 1024):
    """x: [B, S, H]; w_hi: [H, I] (use prepare_dense_weight); returns [B, S, I]."""
    B, S, H = x.shape
    Hw, I = w_hi.shape
    assert Hw == H, "weight must already be in [H, I] layout (prepare_dense_weight)"
    T = B * S
    out_dtype = out_dtype or x.dtype

    tm = min(tm, T)
    tn = min(tn, I)
    T_pad = pl.cdiv(T, tm) * tm
    I_pad = pl.cdiv(I, tn) * tn

    x2 = x.reshape(T, H)
    if T_pad != T:
        x2 = jnp.pad(x2, ((0, T_pad - T), (0, 0)))
    w = w_hi
    b = dense_b.reshape(1, I)
    if I_pad != I:
        w = jnp.pad(w, ((0, 0), (0, I_pad - I)))
        b = jnp.pad(b, ((0, 0), (0, I_pad - I)))
    g = ln_w.reshape(1, H)
    bln = ln_b.reshape(1, H)

    gi = T_pad // tm            # token tiles
    gj = I_pad // tn            # intermediate tiles

    # Choose grid order to minimize HBM traffic:
    #   grid=(i, j): W re-streamed gi times, x streamed once.
    #   grid=(j, i): x re-streamed gj times, W streamed once.
    x_bytes = x2.size * x2.dtype.itemsize
    w_bytes = w.size * w.dtype.itemsize
    if w_bytes * gi + x_bytes <= x_bytes * gj + w_bytes:
        grid = (gi, gj)
        x_map = lambda i, j: (i, 0)
        ln_map = lambda i, j: (0, 0)
        w_map = lambda i, j: (0, j)
        b_map = lambda i, j: (0, j)
        o_map = lambda i, j: (i, j)
    else:
        grid = (gj, gi)
        x_map = lambda j, i: (i, 0)
        ln_map = lambda j, i: (0, 0)
        w_map = lambda j, i: (0, j)
        b_map = lambda j, i: (0, j)
        o_map = lambda j, i: (i, j)

    out = pl.pallas_call(
        functools.partial(_intermediate_kernel, eps=eps),
        out_shape=jax.ShapeDtypeStruct((T_pad, I_pad), out_dtype),
        grid=grid,
        in_specs=[
            pl.BlockSpec((tm, H), x_map),      # x tile
            pl.BlockSpec((1, H), ln_map),      # ln weight (grid-invariant)
            pl.BlockSpec((1, H), ln_map),      # ln bias   (grid-invariant)
            pl.BlockSpec((H, tn), w_map),      # dense weight tile (streamed)
            pl.BlockSpec((1, tn), b_map),      # dense bias tile
        ],
        out_specs=pl.BlockSpec((tm, tn), o_map),
        compiler_params=pltpu.CompilerParams(
            dimension_semantics=("parallel", "parallel"),
            vmem_limit_bytes=vmem_limit_bytes,
        ),
    )(x2, g, bln, w, b)

    out = out[:T, :I]
    return out.reshape(B, S, I)


def _reference(x, ln_w, ln_b, dense_w_ih, dense_b, eps=1e-5, compute_dtype=None):
    """Pure-JAX reference matching the PyTorch module (dense_w_ih is [I, H])."""
    compute_dtype = compute_dtype or x.dtype
    xf = x.astype(jnp.float32)
    msq = jnp.mean(xf * xf, axis=-1, keepdims=True)
    mean = jnp.mean(xf, axis=-1, keepdims=True)
    y = (xf - mean) * lax.rsqrt(msq + eps)
    y = (y.astype(compute_dtype) * ln_w.astype(compute_dtype)
         + ln_b.astype(compute_dtype))
    z = jnp.dot(y, dense_w_ih.T.astype(compute_dtype),
                preferred_element_type=jnp.float32) + dense_b.astype(jnp.float32)
    return _gelu_exact(z)


if __name__ == "__main__":
    key = jax.random.PRNGKey(0)

    # ------- test 1: toy shapes, f32 end-to-end (single tile) ----------------
    B, S, H, I = 2, 8, 32, 64
    k0, k1, k2, k3, k4 = jax.random.split(key, 5)
    x = jax.random.normal(k0, (B, S, H), dtype=jnp.float32)
    ln_w = 1.0 + 0.1 * jax.random.normal(k1, (H,), dtype=jnp.float32)
    ln_b = 0.1 * jax.random.normal(k2, (H,), dtype=jnp.float32)
    dense_w = jax.random.normal(k3, (I, H), dtype=jnp.float32) * 0.02  # PyTorch [out, in]
    dense_b = jax.random.normal(k4, (I,), dtype=jnp.float32) * 0.02

    w_hi = prepare_dense_weight(dense_w)                     # [H, I], done once
    out = alexa_tm_intermediate(x, ln_w, ln_b, w_hi, dense_b)
    out = jax.block_until_ready(out)
    ref = _reference(x, ln_w, ln_b, dense_w, dense_b)
    assert out.shape == (B, S, I)
    assert jnp.allclose(out, ref, atol=1e-5, rtol=1e-5)

    # ------- test 2: tiled path, bf16 activations/weights, T padding ---------
    B2, S2, H2, I2 = 2, 200, 256, 384                        # T=400 -> padded to 512
    k5, k6, k7, k8, k9 = jax.random.split(k4, 5)
    x2 = jax.random.normal(k5, (B2, S2, H2), dtype=jnp.float32).astype(jnp.bfloat16)
    ln_w2 = (1.0 + 0.1 * jax.random.normal(k6, (H2,), dtype=jnp.float32)).astype(jnp.bfloat16)
    ln_b2 = (0.1 * jax.random.normal(k7, (H2,), dtype=jnp.float32)).astype(jnp.bfloat16)
    dense_w2 = (jax.random.normal(k8, (I2, H2), dtype=jnp.float32) * 0.02)
    dense_b2 = (jax.random.normal(k9, (I2,), dtype=jnp.float32) * 0.02).astype(jnp.bfloat16)

    w_hi2 = prepare_dense_weight(dense_w2, jnp.bfloat16)      # bf16 MXU inputs
    out2 = alexa_tm_intermediate(x2, ln_w2, ln_b2, w_hi2, dense_b2, tm=128, tn=128)
    out2 = jax.block_until_ready(out2)
    ref2 = _reference(x2, ln_w2, ln_b2, dense_w2.astype(jnp.bfloat16), dense_b2,
                      compute_dtype=jnp.bfloat16)
    assert out2.shape == (B2, S2, I2)
    assert jnp.allclose(out2.astype(jnp.float32), ref2, atol=2e-2, rtol=2e-2)

    print("KERNEL_OK")
</pallas_src>

<mosaic_0001>
module attributes {stable_mosaic.version = 11 : i64} {
  func.func @_intermediate_kernel(%arg0: i32, %arg1: i32, %arg2: memref<16x32xf32, #tpu.memory_space<vmem>>, %arg3: memref<1x32xf32, #tpu.memory_space<vmem>>, %arg4: memref<1x32xf32, #tpu.memory_space<vmem>>, %arg5: memref<32x64xf32, #tpu.memory_space<vmem>>, %arg6: memref<1x64xf32, #tpu.memory_space<vmem>>, %arg7: memref<16x64xf32, #tpu.memory_space<vmem>>) attributes {dimension_semantics = [#tpu.dimension_semantics<parallel>, #tpu.dimension_semantics<parallel>], iteration_bounds = array<i64: 1, 1>, scalar_prefetch = 0 : i64, scratch_operands = 0 : i64, tpu.core_type = #tpu.core_type<tc>, window_params = [{transform_indices = @transform_0, window_bounds = array<i64: 16, 32>}, {pipeline_mode = #tpu.pipeline_mode<synchronous>, transform_indices = @transform_1, window_bounds = array<i64: 1, 32>}, {pipeline_mode = #tpu.pipeline_mode<synchronous>, transform_indices = @transform_2, window_bounds = array<i64: 1, 32>}, {transform_indices = @transform_3, window_bounds = array<i64: 32, 64>}, {transform_indices = @transform_4, window_bounds = array<i64: 1, 64>}, {transform_indices = @transform_5, window_bounds = array<i64: 16, 64>}]} {
    %c0 = arith.constant 0 : index
    %c0_0 = arith.constant 0 : index
    %0 = vector.load %arg2[%c0, %c0_0] : memref<16x32xf32, #tpu.memory_space<vmem>>, vector<16x32xf32>
    %1 = arith.mulf %0, %0 : vector<16x32xf32>
    %cst = arith.constant dense<0.000000e+00> : vector<16xf32>
    %2 = vector.multi_reduction <add>, %1, %cst [1] : vector<16x32xf32> to vector<16xf32>
    %3 = vector.shape_cast %2 : vector<16xf32> to vector<16x1xf32>
    %cst_1 = arith.constant 3.200000e+01 : f32
    %4 = vector.broadcast %cst_1 : f32 to vector<16x1xf32>
    %5 = arith.divf %3, %4 : vector<16x1xf32>
    %cst_2 = arith.constant dense<0.000000e+00> : vector<16xf32>
    %6 = vector.multi_reduction <add>, %0, %cst_2 [1] : vector<16x32xf32> to vector<16xf32>
    %7 = vector.shape_cast %6 : vector<16xf32> to vector<16x1xf32>
    %cst_3 = arith.constant 3.200000e+01 : f32
    %8 = vector.broadcast %cst_3 : f32 to vector<16x1xf32>
    %9 = arith.divf %7, %8 : vector<16x1xf32>
    %10 = vector.broadcast %9 : vector<16x1xf32> to vector<16x32xf32>
    %11 = arith.subf %0, %10 : vector<16x32xf32>
    %cst_4 = arith.constant 9.99999974E-6 : f32
    %12 = vector.broadcast %cst_4 : f32 to vector<16x1xf32>
    %13 = arith.addf %5, %12 : vector<16x1xf32>
    %14 = math.rsqrt %13 : vector<16x1xf32>
    %15 = vector.broadcast %14 : vector<16x1xf32> to vector<16x32xf32>
    %16 = arith.mulf %11, %15 : vector<16x32xf32>
    %c0_5 = arith.constant 0 : index
    %c0_6 = arith.constant 0 : index
    %17 = vector.load %arg3[%c0_5, %c0_6] : memref<1x32xf32, #tpu.memory_space<vmem>>, vector<1x32xf32>
    %18 = vector.broadcast %17 : vector<1x32xf32> to vector<16x32xf32>
    %19 = arith.mulf %16, %18 : vector<16x32xf32>
    %c0_7 = arith.constant 0 : index
    %c0_8 = arith.constant 0 : index
    %20 = vector.load %arg4[%c0_7, %c0_8] : memref<1x32xf32, #tpu.memory_space<vmem>>, vector<1x32xf32>
    %21 = vector.broadcast %20 : vector<1x32xf32> to vector<16x32xf32>
    %22 = arith.addf %19, %21 : vector<16x32xf32>
    %c0_9 = arith.constant 0 : index
    %c0_10 = arith.constant 0 : index
    %23 = vector.load %arg5[%c0_9, %c0_10] : memref<32x64xf32, #tpu.memory_space<vmem>>, vector<32x64xf32>
    %cst_11 = arith.constant dense<0.000000e+00> : vector<16x64xf32>
    %24 = tpu.matmul %22, %23, %cst_11 {dimension_numbers = #tpu.dot_dimension_numbers<[1], [0], [0], [1], [0, 0, 1, 1], [], []>} : vector<16x32xf32>, vector<32x64xf32>, vector<16x64xf32> -> vector<16x64xf32>
    %c0_12 = arith.constant 0 : index
    %c0_13 = arith.constant 0 : index
    %25 = vector.load %arg6[%c0_12, %c0_13] : memref<1x64xf32, #tpu.memory_space<vmem>>, vector<1x64xf32>
    %26 = vector.broadcast %25 : vector<1x64xf32> to vector<16x64xf32>
    %27 = arith.addf %24, %26 : vector<16x64xf32>
    %cst_14 = arith.constant 5.000000e-01 : f32
    %28 = vector.broadcast %cst_14 : f32 to vector<16x64xf32>
    %29 = arith.mulf %28, %27 : vector<16x64xf32>
    %cst_15 = arith.constant 0.707106769 : f32
    %30 = vector.broadcast %cst_15 : f32 to vector<16x64xf32>
    %31 = arith.mulf %27, %30 : vector<16x64xf32>
    %32 = math.erf %31 : vector<16x64xf32>
    %cst_16 = arith.constant 1.000000e+00 : f32
    %33 = vector.broadcast %cst_16 : f32 to vector<16x64xf32>
    %34 = arith.addf %33, %32 : vector<16x64xf32>
    %35 = arith.mulf %29, %34 : vector<16x64xf32>
    %c0_17 = arith.constant 0 : index
    %c0_18 = arith.constant 0 : index
    %36 = vector.load %arg7[%c0_17, %c0_18] : memref<16x64xf32, #tpu.memory_space<vmem>>, vector<16x64xf32>
    tpu.vector_store %arg7[%c0_17, %c0_18], %35 {strides = array<i32>} : memref<16x64xf32, #tpu.memory_space<vmem>>, vector<16x64xf32>,
    return
  }
  func.func @transform_0(%arg0: i32, %arg1: i32) -> (i32, i32) {
    %c0_i32 = arith.constant 0 : i32
    %c0_i32_0 = arith.constant 0 : i32
    return %arg0, %c0_i32 : i32, i32
  }
  func.func @transform_1(%arg0: i32, %arg1: i32) -> (i32, i32) {
    %c0_i32 = arith.constant 0 : i32
    %c0_i32_0 = arith.constant 0 : i32
    %c0_i32_1 = arith.constant 0 : i32
    return %c0_i32, %c0_i32_0 : i32, i32
  }
  func.func @transform_2(%arg0: i32, %arg1: i32) -> (i32, i32) {
    %c0_i32 = arith.constant 0 : i32
    %c0_i32_0 = arith.constant 0 : i32
    %c0_i32_1 = arith.constant 0 : i32
    return %c0_i32, %c0_i32_0 : i32, i32
  }
  func.func @transform_3(%arg0: i32, %arg1: i32) -> (i32, i32) {
    %c0_i32 = arith.constant 0 : i32
    %c0_i32_0 = arith.constant 0 : i32
    return %c0_i32, %arg1 : i32, i32
  }
  func.func @transform_4(%arg0: i32, %arg1: i32) -> (i32, i32) {
    %c0_i32 = arith.constant 0 : i32
    %c0_i32_0 = arith.constant 0 : i32
    return %c0_i32, %arg1 : i32, i32
  }
  func.func @transform_5(%arg0: i32, %arg1: i32) -> (i32, i32) {
    %c0_i32 = arith.constant 0 : i32
    return %arg0, %arg1 : i32, i32
  }
}

</mosaic_0001>

<llo_original>
// kernel: tpu_custom_call.1
$region0: #{tpu_custom_call.1}
  #allocation0 [shape = 'u32[]', space=smem, size = 0x4, offset = 0x4, fixed_abs, tag = 'smem constant byte address 0x4 - core index']
  #allocation1 [shape = 'u32[72,128]{1,0:T(1,128)}', space=vmem, size = 0x9000, scoped, tag = 'internal scratch']
  %s0 = inlined_call_operand.hbm [shape: f32[16,32], index: 0, kind: input, shape index: {}]
  %s1 = inlined_call_operand.hbm [shape: f32[1,32], index: 1, kind: input, shape index: {}]
  %s2 = inlined_call_operand.vmem [shape: f32[1,32], index: 2, kind: input, shape index: {}]
  %s3 = inlined_call_operand.hbm [shape: f32[32,64], index: 3, kind: input, shape index: {}]
  %s4 = inlined_call_operand.vmem [shape: f32[1,64], index: 4, kind: input, shape index: {}]
  %s5 = inlined_call_operand.hbm [shape: f32[16,64], index: 5, kind: output, shape index: {}]
  %s6 = sld [smem:[#allocation0]]
  $region42: #{tpu_custom_call.1} parent=0
    _
  %s8 = ssub.s32 1, %s6
  %s9 = scalar_select 0, %s8, %s6
  $region1: #{tpu_custom_call.1} parent=0
    #allocation2 [shape = 'u8[8192]{0}', space=vmem, size = 0x2000, scoped, tag = 'input window, operand 0, single buffered']
    #allocation3 [shape = 's32[1]{0}', space=sflag, size = 0x4, scoped, tag = 'scoped memory for tpu_custom_call.1']
    #allocation4 [shape = 's32[1]{0}', space=sflag, size = 0x4, scoped, tag = 'scoped memory for tpu_custom_call.1']
    #allocation5 [shape = 'u8[512]{0}', space=vmem, size = 0x400, scoped, tag = 'input window, operand 1, single buffered']
    #allocation6 [shape = 's32[1]{0}', space=sflag, size = 0x4, scoped, tag = 'scoped memory for tpu_custom_call.1']
    #allocation7 [shape = 'u8[16384]{0}', space=vmem, size = 0x4000, scoped, tag = 'input window, operand 3, single buffered']
    #allocation8 [shape = 'u8[8192]{0}', space=vmem, size = 0x2000, scoped, tag = 'output window, operand 0, single buffered']
    %10 = vsyncpa [#allocation3], 0
    %11 = vsyncpa [#allocation6], 0
    %12 = vsyncpa [#allocation4], 0
    // Predicated region
    $region2: #{tpu_custom_call.1} parent=1 // pred_check
      _
    $region3: #{tpu_custom_call.1} parent=1 // pred_check_branch
      %14 = sbr.rel (0) target = $region5
    $region4: #{tpu_custom_call.1} parent=1 // pred_region
      %16 = vsyncadd [#allocation3], 0
      %s17 = sshll.u32 %s0, 4
      %s18 = int_to_ptr.hbm [resolvable:$true] %s17
      %s19 = sshll.u32 [#allocation2], 4
      %s20 = int_to_ptr.vmem [resolvable:$true] %s19
      %25 = dma.hbm_to_vmem [thread:$0]  %s18, 256, %s20, [#allocation3], 128, 128, 8
    $region5: #{tpu_custom_call.1} parent=1 // pred_fallthru
      _
    // Predicated region
    $region6: #{tpu_custom_call.1} parent=1 // pred_check
      _
    $region7: #{tpu_custom_call.1} parent=1 // pred_check_branch
      %27 = sbr.rel (0) target = $region9
    $region8: #{tpu_custom_call.1} parent=1 // pred_region
      %29 = vsyncadd [#allocation6], 0
      %s31 = sshll.u32 %s1, 4
      %s32 = int_to_ptr.hbm [resolvable:$true] %s31
      %s33 = sshll.u32 [#allocation5], 4
      %s34 = int_to_ptr.vmem [resolvable:$true] %s33
      %36 = dma.hbm_to_vmem [thread:$0]  %s32, 16, %s34, [#allocation6]
    $region9: #{tpu_custom_call.1} parent=1 // pred_fallthru
      _
    // Predicated region
    $region10: #{tpu_custom_call.1} parent=1 // pred_check
      _
    $region11: #{tpu_custom_call.1} parent=1 // pred_check_branch
      %38 = sbr.rel (0) target = $region13
    $region12: #{tpu_custom_call.1} parent=1 // pred_region
      _
    $region13: #{tpu_custom_call.1} parent=1 // pred_fallthru
      _
    // Predicated region
    $region14: #{tpu_custom_call.1} parent=1 // pred_check
      _
    $region15: #{tpu_custom_call.1} parent=1 // pred_check_branch
      %40 = sbr.rel (0) target = $region17
    $region16: #{tpu_custom_call.1} parent=1 // pred_region
      %42 = vsyncadd [#allocation6], 0
      %s43 = sshll.u32 %s3, 4
      %s44 = int_to_ptr.hbm [resolvable:$true] %s43
      %s45 = sshll.u32 [#allocation7], 4
      %s46 = int_to_ptr.vmem [resolvable:$true] %s45
      %51 = dma.hbm_to_vmem [thread:$0]  %s44, 512, %s46, [#allocation6], 128, 128, 8
    $region17: #{tpu_custom_call.1} parent=1 // pred_fallthru
      _
    // Predicated region
    $region18: #{tpu_custom_call.1} parent=1 // pred_check
      _
    $region19: #{tpu_custom_call.1} parent=1 // pred_check_branch
      %53 = sbr.rel (0) target = $region21
    $region20: #{tpu_custom_call.1} parent=1 // pred_region
      _
    $region21: #{tpu_custom_call.1} parent=1 // pred_fallthru
      _
    // Predicated region
    $region22: #{tpu_custom_call.1} parent=1 // pred_check
      _
    $region23: #{tpu_custom_call.1} parent=1 // pred_check_branch
      %55 = sbr.rel (0) target = $region25
    $region24: #{tpu_custom_call.1} parent=1 // pred_region
      %57 = dma.done [#allocation3], 256
    $region25: #{tpu_custom_call.1} parent=1 // pred_fallthru
      _
    // Predicated region
    $region26: #{tpu_custom_call.1} parent=1 // pred_check
      _
    $region27: #{tpu_custom_call.1} parent=1 // pred_check_branch
      %59 = sbr.rel (0) target = $region29
    $region28: #{tpu_custom_call.1} parent=1 // pred_region
      %61 = dma.done [#allocation6], 16
    $region29: #{tpu_custom_call.1} parent=1 // pred_fallthru
      _
    // Predicated region
    $region30: #{tpu_custom_call.1} parent=1 // pred_check
      _
    $region31: #{tpu_custom_call.1} parent=1 // pred_check_branch
      %63 = sbr.rel (0) target = $region33
    $region32: #{tpu_custom_call.1} parent=1 // pred_region
      %65 = dma.done [#allocation6], 512
    $region33: #{tpu_custom_call.1} parent=1 // pred_fallthru
      _
    %v66 = vld [vmem:[#allocation2] sm:$0xff]
    %v67 = vld [vmem:[#allocation2 + $0x8] sm:$0xff]
    %v68 = vmul.f32 %v66, %v66
    %v69 = vmul.f32 %v67, %v67
    %vm70 = vcmask 261120
    %v71 = vsel %vm70, %v68, 0.0
    %72 = vadd.xlane.f32.xlu0 %v71
    %v73 = vpop.xlane.xlu0 %72
    %v74 = vsel %vm70, %v69, 0.0
    %75 = vadd.xlane.f32.xlu0 %v74
    %v76 = vpop.xlane.xlu0 %75
    %v77 = vrcp.pop 32.0
    %v78 = vmul.f32 32.0, %v77
    %v79 = vsub.f32 1.0, %v78
    %v80 = vmul.f32 %v77, %v79
    %v81 = vadd.f32 %v77, %v80
    %vm82 = vweird.f32 %v77
    %v83 = vsel %vm82, %v77, %v81
    %v84 = vmul.f32 %v73, %v83
    %v85 = vmul.f32 %v76, %v83
    %v86 = vsel %vm70, %v66, 0.0
    %87 = vadd.xlane.f32.xlu0 %v86
    %v88 = vpop.xlane.xlu0 %87
    %v89 = vsel %vm70, %v67, 0.0
    %90 = vadd.xlane.f32.xlu0 %v89
    %v91 = vpop.xlane.xlu0 %90
    %v92 = vmul.f32 %v88, %v83
    %v93 = vmul.f32 %v91, %v83
    %v94 = vsub.f32 %v66, %v92
    %v95 = vsub.f32 %v67, %v93
    %v96 = vadd.f32 %v84, 1e-05
    %v97 = vadd.f32 %v85, 1e-05
    %v98 = vrsqrt.pop %v96
    %v99 = vmul.f32 %v98, %v96
    %v100 = vmul.f32 %v99, %v98
    %v101 = vmul.f32 0.5, %v100
    %v102 = vsub.f32 1.5, %v101
    %v103 = vmul.f32 %v98, %v102
    %vm104 = vweird.f32 %v96
    %vm105 = vweird.f32 %v98
    %vm106 = vmor %vm104, %vm105
    %v107 = vsel %vm106, %v98, %v103
    %v108 = vrsqrt.pop %v97
    %v109 = vmul.f32 %v108, %v97
    %v110 = vmul.f32 %v109, %v108
    %v111 = vmul.f32 0.5, %v110
    %v112 = vsub.f32 1.5, %v111
    %v113 = vmul.f32 %v108, %v112
    %vm114 = vweird.f32 %v97
    %vm115 = vweird.f32 %v108
    %vm116 = vmor %vm114, %vm115
    %v117 = vsel %vm116, %v108, %v113
    %v118 = vmul.f32 %v94, %v107
    %v119 = vmul.f32 %v95, %v117
    %v120 = vld [vmem:[#allocation5] sm:$0x1]
    %v122 = vperm.slane %v120, 0
    %v124 = vmul.f32 %v118, %v122
    %v125 = vmul.f32 %v119, %v122
    %v126 = vld [vmem:[%s2] sm:$0x1]
    %v128 = vperm.slane %v126, 0
    %v130 = vadd.f32 %v124, %v128
    %v131 = vadd.f32 %v125, %v128
    %v132 = vld [vmem:[#allocation7] sm:$0xff]
    %v133 = vld [vmem:[#allocation7 + $0x8] sm:$0xff]
    %v134 = vld [vmem:[#allocation7 + $0x10] sm:$0xff]
    %v135 = vld [vmem:[#allocation7 + $0x18] sm:$0xff]
    %v136 = vld [vmem:[%s4] sm:$0x1]
    %v138 = vperm.slane %v136, 0
    %v141 = vsel %vm70, %v130, 0
    %v144 = vsel %vm70, %v131, 0
    %146 = vmatpush.msra.mxu0 0.0
    %147 = vmatpush.msra.mxu0 0.0
    %148 = vmatpush.msra.mxu0 0.0
    %149 = vmatpush.msra.mxu0 0.0
    %150 = vmatpush.msra.mxu0 0.0
    %151 = vmatpush.msra.mxu0 0.0
    %152 = vmatpush.msra.mxu0 0.0
    %153 = vmatpush.msra.mxu0 0.0
    %154 = vmatpush.msra.mxu0 0.0
    %155 = vmatpush.msra.mxu0 0.0
    %156 = vmatpush.msra.mxu0 0.0
    %157 = vmatpush.msra.mxu0 0.0
    %158 = vmatpush.msra.mxu0 %v135
    %159 = vmatpush.msra.mxu0 %v134
    %160 = vmatpush.msra.mxu0 %v133
    %161 = vmatpush.msra.mxu0 %v132
    %162 = vmatmul.f32.gmra.mxu0 %v141
    %v163 = vpop.f32.mrf.mxu0
    %v164 = vadd.f32 %v138, %v163
    %165 = vmatmul.f32.gmra.mxu0 %v144
    %v166 = vpop.f32.mrf.mxu0
    %v167 = vadd.f32 %v138, %v166
    %168 = vdwg.mxu0
    %v169 = vmul.f32 %v164, 0.5
    %v170 = vmul.f32 %v167, 0.5
    %v171 = vmul.f32 %v164, 0.70710677
    %v172 = vmul.f32 %v167, 0.70710677
    %v173 = vmul.f32 %v171, %v171
    %v174 = vmin.f32 16.0, %v173
    %v175 = vmul.f32 %v174, 2.1237322e-06
    %v176 = vadd.f32 %v175, 0.00028619796
    %v177 = vmul.f32 %v174, %v176
    %v178 = vadd.f32 %v177, 0.0036580483
    %v179 = vmul.f32 %v174, %v178
    %v180 = vadd.f32 %v179, 0.05243302
    %v181 = vmul.f32 %v174, %v180
    %v182 = vadd.f32 %v181, 0.18741608
    %v183 = vmul.f32 %v174, %v182
    %v184 = vadd.f32 %v183, 1.1283791
    %v185 = vmul.f32 %v171, %v184
    %v186 = vmul.f32 %v174, 3.8918573e-05
    %v187 = vadd.f32 %v186, 0.001143296
    %v188 = vmul.f32 %v174, %v187
    %v189 = vadd.f32 %v188, 0.014752088
    %v190 = vmul.f32 %v174, %v189
    %v191 = vadd.f32 %v190, 0.112945676
    %v192 = vmul.f32 %v174, %v191
    %v193 = vadd.f32 %v192, 0.4994258
    %v194 = vmul.f32 %v174, %v193
    %v195 = vadd.f32 %v194, 1.0
    %v196 = vrcp.pop %v195
    %v197 = vmul.f32 %v195, %v196
    %v198 = vsub.f32 1.0, %v197
    %v199 = vmul.f32 %v196, %v198
    %v200 = vadd.f32 %v196, %v199
    %vm201 = vweird.f32 %v195
    %vm202 = vweird.f32 %v196
    %vm203 = vmor %vm201, %vm202
    %v204 = vsel %vm203, %v196, %v200
    %v205 = vand.u32 2147483647, %v195
    %vm206 = vcmp.eq.f32.partialorder %v205, 8.507059e+37
    %v207 = vand.u32 %v195, 2147483648
    %v208 = vor.u32 1.1754944e-38, %v207
    %v209 = vsel %vm206, %v208, %v204
    %v210 = vmul.f32 %v185, %v209
    %v211 = vmin.f32 %v210, 1.0
    %v212 = vmax.f32 %v211, -1.0
    %v213 = vmul.f32 %v172, %v172
    %v214 = vmin.f32 16.0, %v213
    %v215 = vmul.f32 %v214, 2.1237322e-06
    %v216 = vadd.f32 %v215, 0.00028619796
    %v217 = vmul.f32 %v214, %v216
    %v218 = vadd.f32 %v217, 0.0036580483
    %v219 = vmul.f32 %v214, %v218
    %v220 = vadd.f32 %v219, 0.05243302
    %v221 = vmul.f32 %v214, %v220
    %v222 = vadd.f32 %v221, 0.18741608
    %v223 = vmul.f32 %v214, %v222
    %v224 = vadd.f32 %v223, 1.1283791
    %v225 = vmul.f32 %v172, %v224
    %v226 = vmul.f32 %v214, 3.8918573e-05
    %v227 = vadd.f32 %v226, 0.001143296
    %v228 = vmul.f32 %v214, %v227
    %v229 = vadd.f32 %v228, 0.014752088
    %v230 = vmul.f32 %v214, %v229
    %v231 = vadd.f32 %v230, 0.112945676
    %v232 = vmul.f32 %v214, %v231
    %v233 = vadd.f32 %v232, 0.4994258
    %v234 = vmul.f32 %v214, %v233
    %v235 = vadd.f32 %v234, 1.0
    %v236 = vrcp.pop %v235
    %v237 = vmul.f32 %v235, %v236
    %v238 = vsub.f32 1.0, %v237
    %v239 = vmul.f32 %v236, %v238
    %v240 = vadd.f32 %v236, %v239
    %vm241 = vweird.f32 %v235
    %vm242 = vweird.f32 %v236
    %vm243 = vmor %vm241, %vm242
    %v244 = vsel %vm243, %v236, %v240
    %v245 = vand.u32 2147483647, %v235
    %vm246 = vcmp.eq.f32.partialorder %v245, 8.507059e+37
    %v247 = vand.u32 %v235, 2147483648
    %v248 = vor.u32 1.1754944e-38, %v247
    %v249 = vsel %vm246, %v248, %v244
    %v250 = vmul.f32 %v225, %v249
    %v251 = vmin.f32 %v250, 1.0
    %v252 = vmax.f32 %v251, -1.0
    %v253 = vadd.f32 %v212, 1.0
    %v254 = vadd.f32 %v252, 1.0
    %v255 = vmul.f32 %v169, %v253
    %v256 = vmul.f32 %v170, %v254
    %vm257 = vcmask 523264
    %258 = vst.msk [vmem:[#allocation8] sm:$0xff] %vm257, %v255
    %259 = vst.msk [vmem:[#allocation8 + $0x8] sm:$0xff] %vm257, %v256
    // Predicated region
    $region34: #{tpu_custom_call.1} parent=1 // pred_check
      _
    $region35: #{tpu_custom_call.1} parent=1 // pred_check_branch
      %261 = sbr.rel (0) target = $region37
    $region36: #{tpu_custom_call.1} parent=1 // pred_region
      %263 = vsyncadd [#allocation4], 0
      %s264 = sshll.u32 [#allocation8], 4
      %s265 = int_to_ptr.vmem [resolvable:$true] %s264
      %s266 = sshll.u32 %s5, 4
      %s267 = int_to_ptr.hbm [resolvable:$true] %s266
      %272 = dma.vmem_to_hbm [thread:$0]  %s265, 256, %s267, [#allocation4], 128, 128, 8
    $region37: #{tpu_custom_call.1} parent=1 // pred_fallthru
      _
    // Predicated region
    $region38: #{tpu_custom_call.1} parent=1 // pred_check
      _
    $region39: #{tpu_custom_call.1} parent=1 // pred_check_branch
      %274 = sbr.rel (0) target = $region41
    $region40: #{tpu_custom_call.1} parent=1 // pred_region
      %276 = dma.done [#allocation4], 256
    $region41: #{tpu_custom_call.1} parent=1 // pred_fallthru
      _
    %277 = vsyncpa [#allocation3], 1
    %278 = vsyncpa [#allocation6], 1
    %279 = vsyncpa [#allocation4], 1

</llo_original>
